<compile_context>
chip_gen: v5e
topology: v5e:2x2
jax: 0.10.0
libtpu: 0.0.40
codegen_flags: <defaults>
</compile_context>

<pallas_src>
import functools

import jax
import jax.numpy as jnp
from jax.experimental import pallas as pl
from jax.experimental.pallas import tpu as pltpu

_LANES = 128


def _round_up(a, m):
    return -(-a // m) * m


def _sublane_multiple(dtype):
    # Minimum second-minor tile: 8 for 4-byte, 16 for 2-byte, 32 for 1-byte.
    itemsize = jnp.dtype(dtype).itemsize
    return max(8, 32 // max(itemsize, 1))


def _mlp_kernel(p_ref, x_ref, o_ref, *, hidden):
    # p_ref: f32[3*hidden + 1] in SMEM, packed as w1 | b1 | w2 | b2.
    # x_ref / o_ref: [tile_rows, 128] lane-dense batch tile in VMEM.
    cdt = o_ref.dtype
    lanes = x_ref.shape[-1]
    x = x_ref[...]

    def param(idx):
        s = p_ref[idx]                      # f32 scalar read from SMEM
        if cdt == jnp.float32:
            return s                        # scalar splat on the VPU
        # Sub-32-bit compute: splat to a single (1, lanes) row and convert
        # once (tiny vector op), then broadcast along sublanes inside the FMA.
        # Avoids any sub-32-bit scalar arithmetic.
        return jnp.broadcast_to(s, (1, lanes)).astype(cdt)

    acc = jnp.broadcast_to(param(3 * hidden), x.shape).astype(cdt)  # fc2 bias
    for j in range(hidden):  # fully unrolled: hidden x (FMA + max + FMA), pure VPU
        h = jnp.maximum(x * param(j) + param(hidden + j), 0.0)      # relu(fc1)
        acc = acc + h * param(2 * hidden + j)                       # fc2 accum
    o_ref[...] = acc.astype(o_ref.dtype)


def net_forward(x, w1, b1, w2, b2, *, max_tile_rows=2048):
    """Forward pass of Net.

    x : [B, 1] input (PyTorch layout).
    w1: [10, 1], b1: [10]   (fc1.weight, fc1.bias, PyTorch layout)
    w2: [1, 10], b2: [1]    (fc2.weight, fc2.bias, PyTorch layout)
    returns: [B, 1] in x.dtype (compute is done in x.dtype).
    """
    B = x.shape[0]
    dt = x.dtype
    if B == 0:
        return jnp.zeros((0, 1), dt)

    hidden = w1.shape[0]

    # Pack all parameters into a single f32 SMEM vector: w1 | b1 | w2 | b2.
    params = jnp.concatenate([
        w1.reshape(-1).astype(jnp.float32),
        b1.reshape(-1).astype(jnp.float32),
        w2.reshape(-1).astype(jnp.float32),
        b2.reshape(-1).astype(jnp.float32),
    ])

    sub = _sublane_multiple(dt)

    if B % _LANES == 0:
        # Fast path: free bitcast reshape, no HBM round-trip outside the kernel.
        rows = B // _LANES
        xp = x.reshape(rows, _LANES)
        padded = False
    else:
        # Fallback: pad to the minimum legal tile-aligned row count only.
        # TODO(synk): a manual-DMA (pl.ANY) ragged tail could remove this pad too.
        rows = _round_up(pl.cdiv(B, _LANES), sub)
        xp = jnp.pad(x.reshape(-1), (0, rows * _LANES - B)).reshape(rows, _LANES)
        padded = True

    # Tile selection: biggest tile up to max_tile_rows, but keep >= 2 grid
    # steps when possible so "parallel" actually shards across TCs (v7x).
    if rows <= sub:
        tile_rows = rows                     # block == full dim -> always legal
    else:
        tile_rows = min(_round_up(max_tile_rows, sub),
                        _round_up(pl.cdiv(rows, 2), sub))
        tile_rows = max(tile_rows, sub)

    grid = (pl.cdiv(rows, tile_rows),)       # ragged last block handled by Pallas

    n_elems = rows * _LANES
    cost = pl.CostEstimate(
        flops=5 * hidden * n_elems,
        transcendentals=0,
        bytes_accessed=2 * n_elems * jnp.dtype(dt).itemsize + params.size * 4,
    )

    out = pl.pallas_call(
        functools.partial(_mlp_kernel, hidden=hidden),
        out_shape=jax.ShapeDtypeStruct((rows, _LANES), dt),
        grid=grid,
        in_specs=[
            pl.BlockSpec(memory_space=pltpu.MemorySpace.SMEM),     # packed params
            pl.BlockSpec((tile_rows, _LANES), lambda i: (i, 0)),   # x tile
        ],
        out_specs=pl.BlockSpec((tile_rows, _LANES), lambda i: (i, 0)),
        compiler_params=pltpu.CompilerParams(
            dimension_semantics=("parallel",)),
        cost_estimate=cost,
    )(params, xp)

    if padded:
        return out.reshape(-1)[:B].reshape(B, 1)
    return out.reshape(B, 1)


def init_params(key, dtype=jnp.float32):
    """Deterministic init mirroring nn.Linear defaults, in PyTorch layout."""
    k1, k2, k3, k4 = jax.random.split(key, 4)
    bound1 = 1.0                               # fc1: Linear(1, 10), 1/sqrt(1)
    w1 = jax.random.uniform(k1, (10, 1), dtype, -bound1, bound1)
    b1 = jax.random.uniform(k2, (10,), dtype, -bound1, bound1)
    bound2 = 1.0 / float(jnp.sqrt(10.0))       # fc2: Linear(10, 1), 1/sqrt(10)
    w2 = jax.random.uniform(k3, (1, 10), dtype, -bound2, bound2)
    b2 = jax.random.uniform(k4, (1,), dtype, -bound2, bound2)
    return w1, b1, w2, b2


def _reference(x, w1, b1, w2, b2):
    # Plain JAX reference: relu(x @ W1^T + b1) @ W2^T + b2 (PyTorch semantics).
    return jnp.maximum(x @ w1.T + b1[None, :], 0.0) @ w2.T + b2[None, :]


if __name__ == "__main__":
    key = jax.random.PRNGKey(0)
    k_p, k1, k2, k3, k4 = jax.random.split(key, 5)
    w1, b1, w2, b2 = init_params(k_p)

    # 1) Small batch (pad + slice fallback path).
    x = jax.random.normal(k1, (8, 1), jnp.float32)
    out = jax.block_until_ready(net_forward(x, w1, b1, w2, b2))
    assert out.shape == (8, 1)
    assert jnp.allclose(out, _reference(x, w1, b1, w2, b2), atol=1e-5, rtol=1e-5)

    # 2) Batch not divisible by 128 (pad + slice fallback path).
    x = jax.random.normal(k2, (300, 1), jnp.float32)
    out = jax.block_until_ready(net_forward(x, w1, b1, w2, b2))
    assert out.shape == (300, 1)
    assert jnp.allclose(out, _reference(x, w1, b1, w2, b2), atol=1e-5, rtol=1e-5)

    # 3) Lane-aligned batch: no pad/slice, ragged last grid block, grid >= 2.
    x = jax.random.normal(k3, (1280, 1), jnp.float32)   # rows=10, tile=8, grid=2
    out = jax.block_until_ready(net_forward(x, w1, b1, w2, b2))
    assert out.shape == (1280, 1)
    assert jnp.allclose(out, _reference(x, w1, b1, w2, b2), atol=1e-5, rtol=1e-5)

    # 4) bf16 end-to-end (v6e/v7x fast path): rows=32, tile=16, grid=2.
    xb = jax.random.normal(k4, (4096, 1), jnp.float32).astype(jnp.bfloat16)
    outb = jax.block_until_ready(net_forward(xb, w1, b1, w2, b2))
    refb = _reference(xb.astype(jnp.float32), w1, b1, w2, b2)
    assert outb.shape == (4096, 1)
    assert outb.dtype == jnp.bfloat16
    assert float(jnp.max(jnp.abs(outb.astype(jnp.float32) - refb))) < 0.1

    print("KERNEL_OK")
</pallas_src>

<mosaic_0001>
module attributes {stable_mosaic.version = 11 : i64} {
  func.func @_mlp_kernel(%arg0: i32, %arg1: memref<31xf32, #tpu.memory_space<smem>>, %arg2: memref<8x128xf32, #tpu.memory_space<vmem>>, %arg3: memref<8x128xf32, #tpu.memory_space<vmem>>) attributes {dimension_semantics = [#tpu.dimension_semantics<parallel>], iteration_bounds = array<i64: 1>, scalar_prefetch = 0 : i64, scratch_operands = 0 : i64, tpu.core_type = #tpu.core_type<tc>, window_params = [{transform_indices = @transform_0, window_bounds = array<i64: 31>}, {transform_indices = @transform_1, window_bounds = array<i64: 8, 128>}, {transform_indices = @transform_2, window_bounds = array<i64: 8, 128>}]} {
    %c0 = arith.constant 0 : index
    %c0_0 = arith.constant 0 : index
    %0 = vector.load %arg2[%c0, %c0_0] : memref<8x128xf32, #tpu.memory_space<vmem>>, vector<8x128xf32>
    %c30 = arith.constant 30 : index
    %1 = memref.load %arg1[%c30] : memref<31xf32, #tpu.memory_space<smem>>
    %2 = vector.broadcast %1 : f32 to vector<8x128xf32>
    %c0_1 = arith.constant 0 : index
    %3 = memref.load %arg1[%c0_1] : memref<31xf32, #tpu.memory_space<smem>>
    %4 = vector.broadcast %3 : f32 to vector<8x128xf32>
    %5 = arith.mulf %0, %4 : vector<8x128xf32>
    %c10 = arith.constant 10 : index
    %6 = memref.load %arg1[%c10] : memref<31xf32, #tpu.memory_space<smem>>
    %7 = vector.broadcast %6 : f32 to vector<8x128xf32>
    %8 = arith.addf %5, %7 : vector<8x128xf32>
    %cst = arith.constant 0.000000e+00 : f32
    %9 = vector.broadcast %cst : f32 to vector<8x128xf32>
    %10 = arith.maximumf %8, %9 : vector<8x128xf32>
    %c20 = arith.constant 20 : index
    %11 = memref.load %arg1[%c20] : memref<31xf32, #tpu.memory_space<smem>>
    %12 = vector.broadcast %11 : f32 to vector<8x128xf32>
    %13 = arith.mulf %10, %12 : vector<8x128xf32>
    %14 = arith.addf %2, %13 : vector<8x128xf32>
    %c1 = arith.constant 1 : index
    %15 = memref.load %arg1[%c1] : memref<31xf32, #tpu.memory_space<smem>>
    %16 = vector.broadcast %15 : f32 to vector<8x128xf32>
    %17 = arith.mulf %0, %16 : vector<8x128xf32>
    %c11 = arith.constant 11 : index
    %18 = memref.load %arg1[%c11] : memref<31xf32, #tpu.memory_space<smem>>
    %19 = vector.broadcast %18 : f32 to vector<8x128xf32>
    %20 = arith.addf %17, %19 : vector<8x128xf32>
    %cst_2 = arith.constant 0.000000e+00 : f32
    %21 = vector.broadcast %cst_2 : f32 to vector<8x128xf32>
    %22 = arith.maximumf %20, %21 : vector<8x128xf32>
    %c21 = arith.constant 21 : index
    %23 = memref.load %arg1[%c21] : memref<31xf32, #tpu.memory_space<smem>>
    %24 = vector.broadcast %23 : f32 to vector<8x128xf32>
    %25 = arith.mulf %22, %24 : vector<8x128xf32>
    %26 = arith.addf %14, %25 : vector<8x128xf32>
    %c2 = arith.constant 2 : index
    %27 = memref.load %arg1[%c2] : memref<31xf32, #tpu.memory_space<smem>>
    %28 = vector.broadcast %27 : f32 to vector<8x128xf32>
    %29 = arith.mulf %0, %28 : vector<8x128xf32>
    %c12 = arith.constant 12 : index
    %30 = memref.load %arg1[%c12] : memref<31xf32, #tpu.memory_space<smem>>
    %31 = vector.broadcast %30 : f32 to vector<8x128xf32>
    %32 = arith.addf %29, %31 : vector<8x128xf32>
    %cst_3 = arith.constant 0.000000e+00 : f32
    %33 = vector.broadcast %cst_3 : f32 to vector<8x128xf32>
    %34 = arith.maximumf %32, %33 : vector<8x128xf32>
    %c22 = arith.constant 22 : index
    %35 = memref.load %arg1[%c22] : memref<31xf32, #tpu.memory_space<smem>>
    %36 = vector.broadcast %35 : f32 to vector<8x128xf32>
    %37 = arith.mulf %34, %36 : vector<8x128xf32>
    %38 = arith.addf %26, %37 : vector<8x128xf32>
    %c3 = arith.constant 3 : index
    %39 = memref.load %arg1[%c3] : memref<31xf32, #tpu.memory_space<smem>>
    %40 = vector.broadcast %39 : f32 to vector<8x128xf32>
    %41 = arith.mulf %0, %40 : vector<8x128xf32>
    %c13 = arith.constant 13 : index
    %42 = memref.load %arg1[%c13] : memref<31xf32, #tpu.memory_space<smem>>
    %43 = vector.broadcast %42 : f32 to vector<8x128xf32>
    %44 = arith.addf %41, %43 : vector<8x128xf32>
    %cst_4 = arith.constant 0.000000e+00 : f32
    %45 = vector.broadcast %cst_4 : f32 to vector<8x128xf32>
    %46 = arith.maximumf %44, %45 : vector<8x128xf32>
    %c23 = arith.constant 23 : index
    %47 = memref.load %arg1[%c23] : memref<31xf32, #tpu.memory_space<smem>>
    %48 = vector.broadcast %47 : f32 to vector<8x128xf32>
    %49 = arith.mulf %46, %48 : vector<8x128xf32>
    %50 = arith.addf %38, %49 : vector<8x128xf32>
    %c4 = arith.constant 4 : index
    %51 = memref.load %arg1[%c4] : memref<31xf32, #tpu.memory_space<smem>>
    %52 = vector.broadcast %51 : f32 to vector<8x128xf32>
    %53 = arith.mulf %0, %52 : vector<8x128xf32>
    %c14 = arith.constant 14 : index
    %54 = memref.load %arg1[%c14] : memref<31xf32, #tpu.memory_space<smem>>
    %55 = vector.broadcast %54 : f32 to vector<8x128xf32>
    %56 = arith.addf %53, %55 : vector<8x128xf32>
    %cst_5 = arith.constant 0.000000e+00 : f32
    %57 = vector.broadcast %cst_5 : f32 to vector<8x128xf32>
    %58 = arith.maximumf %56, %57 : vector<8x128xf32>
    %c24 = arith.constant 24 : index
    %59 = memref.load %arg1[%c24] : memref<31xf32, #tpu.memory_space<smem>>
    %60 = vector.broadcast %59 : f32 to vector<8x128xf32>
    %61 = arith.mulf %58, %60 : vector<8x128xf32>
    %62 = arith.addf %50, %61 : vector<8x128xf32>
    %c5 = arith.constant 5 : index
    %63 = memref.load %arg1[%c5] : memref<31xf32, #tpu.memory_space<smem>>
    %64 = vector.broadcast %63 : f32 to vector<8x128xf32>
    %65 = arith.mulf %0, %64 : vector<8x128xf32>
    %c15 = arith.constant 15 : index
    %66 = memref.load %arg1[%c15] : memref<31xf32, #tpu.memory_space<smem>>
    %67 = vector.broadcast %66 : f32 to vector<8x128xf32>
    %68 = arith.addf %65, %67 : vector<8x128xf32>
    %cst_6 = arith.constant 0.000000e+00 : f32
    %69 = vector.broadcast %cst_6 : f32 to vector<8x128xf32>
    %70 = arith.maximumf %68, %69 : vector<8x128xf32>
    %c25 = arith.constant 25 : index
    %71 = memref.load %arg1[%c25] : memref<31xf32, #tpu.memory_space<smem>>
    %72 = vector.broadcast %71 : f32 to vector<8x128xf32>
    %73 = arith.mulf %70, %72 : vector<8x128xf32>
    %74 = arith.addf %62, %73 : vector<8x128xf32>
    %c6 = arith.constant 6 : index
    %75 = memref.load %arg1[%c6] : memref<31xf32, #tpu.memory_space<smem>>
    %76 = vector.broadcast %75 : f32 to vector<8x128xf32>
    %77 = arith.mulf %0, %76 : vector<8x128xf32>
    %c16 = arith.constant 16 : index
    %78 = memref.load %arg1[%c16] : memref<31xf32, #tpu.memory_space<smem>>
    %79 = vector.broadcast %78 : f32 to vector<8x128xf32>
    %80 = arith.addf %77, %79 : vector<8x128xf32>
    %cst_7 = arith.constant 0.000000e+00 : f32
    %81 = vector.broadcast %cst_7 : f32 to vector<8x128xf32>
    %82 = arith.maximumf %80, %81 : vector<8x128xf32>
    %c26 = arith.constant 26 : index
    %83 = memref.load %arg1[%c26] : memref<31xf32, #tpu.memory_space<smem>>
    %84 = vector.broadcast %83 : f32 to vector<8x128xf32>
    %85 = arith.mulf %82, %84 : vector<8x128xf32>
    %86 = arith.addf %74, %85 : vector<8x128xf32>
    %c7 = arith.constant 7 : index
    %87 = memref.load %arg1[%c7] : memref<31xf32, #tpu.memory_space<smem>>
    %88 = vector.broadcast %87 : f32 to vector<8x128xf32>
    %89 = arith.mulf %0, %88 : vector<8x128xf32>
    %c17 = arith.constant 17 : index
    %90 = memref.load %arg1[%c17] : memref<31xf32, #tpu.memory_space<smem>>
    %91 = vector.broadcast %90 : f32 to vector<8x128xf32>
    %92 = arith.addf %89, %91 : vector<8x128xf32>
    %cst_8 = arith.constant 0.000000e+00 : f32
    %93 = vector.broadcast %cst_8 : f32 to vector<8x128xf32>
    %94 = arith.maximumf %92, %93 : vector<8x128xf32>
    %c27 = arith.constant 27 : index
    %95 = memref.load %arg1[%c27] : memref<31xf32, #tpu.memory_space<smem>>
    %96 = vector.broadcast %95 : f32 to vector<8x128xf32>
    %97 = arith.mulf %94, %96 : vector<8x128xf32>
    %98 = arith.addf %86, %97 : vector<8x128xf32>
    %c8 = arith.constant 8 : index
    %99 = memref.load %arg1[%c8] : memref<31xf32, #tpu.memory_space<smem>>
    %100 = vector.broadcast %99 : f32 to vector<8x128xf32>
    %101 = arith.mulf %0, %100 : vector<8x128xf32>
    %c18 = arith.constant 18 : index
    %102 = memref.load %arg1[%c18] : memref<31xf32, #tpu.memory_space<smem>>
    %103 = vector.broadcast %102 : f32 to vector<8x128xf32>
    %104 = arith.addf %101, %103 : vector<8x128xf32>
    %cst_9 = arith.constant 0.000000e+00 : f32
    %105 = vector.broadcast %cst_9 : f32 to vector<8x128xf32>
    %106 = arith.maximumf %104, %105 : vector<8x128xf32>
    %c28 = arith.constant 28 : index
    %107 = memref.load %arg1[%c28] : memref<31xf32, #tpu.memory_space<smem>>
    %108 = vector.broadcast %107 : f32 to vector<8x128xf32>
    %109 = arith.mulf %106, %108 : vector<8x128xf32>
    %110 = arith.addf %98, %109 : vector<8x128xf32>
    %c9 = arith.constant 9 : index
    %111 = memref.load %arg1[%c9] : memref<31xf32, #tpu.memory_space<smem>>
    %112 = vector.broadcast %111 : f32 to vector<8x128xf32>
    %113 = arith.mulf %0, %112 : vector<8x128xf32>
    %c19 = arith.constant 19 : index
    %114 = memref.load %arg1[%c19] : memref<31xf32, #tpu.memory_space<smem>>
    %115 = vector.broadcast %114 : f32 to vector<8x128xf32>
    %116 = arith.addf %113, %115 : vector<8x128xf32>
    %cst_10 = arith.constant 0.000000e+00 : f32
    %117 = vector.broadcast %cst_10 : f32 to vector<8x128xf32>
    %118 = arith.maximumf %116, %117 : vector<8x128xf32>
    %c29 = arith.constant 29 : index
    %119 = memref.load %arg1[%c29] : memref<31xf32, #tpu.memory_space<smem>>
    %120 = vector.broadcast %119 : f32 to vector<8x128xf32>
    %121 = arith.mulf %118, %120 : vector<8x128xf32>
    %122 = arith.addf %110, %121 : vector<8x128xf32>
    %c0_11 = arith.constant 0 : index
    %c0_12 = arith.constant 0 : index
    %123 = vector.load %arg3[%c0_11, %c0_12] : memref<8x128xf32, #tpu.memory_space<vmem>>, vector<8x128xf32>
    tpu.vector_store %arg3[%c0_11, %c0_12], %122 {strides = array<i32>} : memref<8x128xf32, #tpu.memory_space<vmem>>, vector<8x128xf32>,
    return
  }
  func.func @transform_0(%arg0: i32) -> i32 {
    %c0_i32 = arith.constant 0 : i32
    %c0_i32_0 = arith.constant 0 : i32
    return %c0_i32 : i32
  }
  func.func @transform_1(%arg0: i32) -> (i32, i32) {
    %c0_i32 = arith.constant 0 : i32
    %c0_i32_0 = arith.constant 0 : i32
    return %arg0, %c0_i32 : i32, i32
  }
  func.func @transform_2(%arg0: i32) -> (i32, i32) {
    %c0_i32 = arith.constant 0 : i32
    %c0_i32_0 = arith.constant 0 : i32
    return %arg0, %c0_i32 : i32, i32
  }
}

</mosaic_0001>

<llo_original>
// kernel: tpu_custom_call.1
$region0: #{tpu_custom_call.1}
  #allocation0 [shape = 'u32[]', space=smem, size = 0x4, offset = 0x4, fixed_abs, tag = 'smem constant byte address 0x4 - core index']
  #allocation1 [shape = 'u32[72,128]{1,0:T(1,128)}', space=vmem, size = 0x9000, scoped, tag = 'internal scratch']
  %s0 = inlined_call_operand.hbm [shape: f32[31], index: 0, kind: input, shape index: {}]
  %s1 = inlined_call_operand.hbm [shape: f32[8,128], index: 1, kind: input, shape index: {}]
  %s2 = inlined_call_operand.hbm [shape: f32[8,128], index: 2, kind: output, shape index: {}]
  %s3 = sld [smem:[#allocation0]]
  $region26: #{tpu_custom_call.1} parent=0
    _
  %s5 = ssub.s32 1, %s3
  %s6 = scalar_select 0, %s5, %s3
  $region1: #{tpu_custom_call.1} parent=0
    #allocation2 [shape = 'u8[512]{0}', space=smem, size = 0x200, scoped, tag = 'input window, operand 0, single buffered']
    #allocation3 [shape = 's32[1]{0}', space=sflag, size = 0x4, scoped, tag = 'scoped memory for tpu_custom_call.1']
    #allocation4 [shape = 's32[1]{0}', space=sflag, size = 0x4, scoped, tag = 'scoped memory for tpu_custom_call.1']
    #allocation5 [shape = 's32[1]{0}', space=sflag, size = 0x4, scoped, tag = 'scoped memory for tpu_custom_call.1']
    #allocation6 [shape = 'u8[4096]{0}', space=vmem, size = 0x1000, scoped, tag = 'input window, operand 1, single buffered']
    #allocation7 [shape = 'u8[4096]{0}', space=vmem, size = 0x1000, scoped, tag = 'output window, operand 0, single buffered']
    %7 = vsyncpa [#allocation5], 0
    %8 = vsyncpa [#allocation3], 0
    %9 = vsyncpa [#allocation4], 0
    // Predicated region
    $region2: #{tpu_custom_call.1} parent=1 // pred_check
      _
    $region3: #{tpu_custom_call.1} parent=1 // pred_check_branch
      %11 = sbr.rel (0) target = $region5
    $region4: #{tpu_custom_call.1} parent=1 // pred_region
      %13 = vsyncadd [#allocation5], 0
      %s15 = sshll.u32 %s0, 4
      %s16 = int_to_ptr.hbm [resolvable:$true] %s15
      %18 = dma.hbm_to_smem %s16, 16, [#allocation2], [#allocation5]
    $region5: #{tpu_custom_call.1} parent=1 // pred_fallthru
      _
    // Predicated region
    $region6: #{tpu_custom_call.1} parent=1 // pred_check
      _
    $region7: #{tpu_custom_call.1} parent=1 // pred_check_branch
      %20 = sbr.rel (0) target = $region9
    $region8: #{tpu_custom_call.1} parent=1 // pred_region
      %22 = vsyncadd [#allocation3], 0
      %s24 = sshll.u32 %s1, 4
      %s25 = int_to_ptr.hbm [resolvable:$true] %s24
      %s26 = sshll.u32 [#allocation6], 4
      %s27 = int_to_ptr.vmem [resolvable:$true] %s26
      %29 = dma.hbm_to_vmem [thread:$0]  %s25, 128, %s27, [#allocation3]
    $region9: #{tpu_custom_call.1} parent=1 // pred_fallthru
      _
    // Predicated region
    $region10: #{tpu_custom_call.1} parent=1 // pred_check
      _
    $region11: #{tpu_custom_call.1} parent=1 // pred_check_branch
      %31 = sbr.rel (0) target = $region13
    $region12: #{tpu_custom_call.1} parent=1 // pred_region
      %33 = dma.done [#allocation5], 16
    $region13: #{tpu_custom_call.1} parent=1 // pred_fallthru
      _
    // Predicated region
    $region14: #{tpu_custom_call.1} parent=1 // pred_check
      _
    $region15: #{tpu_custom_call.1} parent=1 // pred_check_branch
      %35 = sbr.rel (0) target = $region17
    $region16: #{tpu_custom_call.1} parent=1 // pred_region
      %37 = dma.done [#allocation3], 128
    $region17: #{tpu_custom_call.1} parent=1 // pred_fallthru
      _
    %38 = sfence
    %v39 = vld [vmem:[#allocation6] sm:$0xff]
    %s40 = sld [smem:[#allocation2 + $0x1e]]
    %v41 = vstv %s40
    %s42 = sld [smem:[#allocation2]]
    %v43 = vstv %s42
    %v44 = vmul.f32 %v39, %v43
    %s45 = sld [smem:[#allocation2 + $0xa]]
    %v46 = vstv %s45
    %v47 = vadd.f32 %v44, %v46
    %v48 = vmax.f32 %v47, 0.0
    %s49 = sld [smem:[#allocation2 + $0x14]]
    %v50 = vstv %s49
    %v51 = vmul.f32 %v48, %v50
    %v52 = vadd.f32 %v41, %v51
    %s53 = sld [smem:[#allocation2 + $0x1]]
    %v54 = vstv %s53
    %v55 = vmul.f32 %v39, %v54
    %s56 = sld [smem:[#allocation2 + $0xb]]
    %v57 = vstv %s56
    %v58 = vadd.f32 %v55, %v57
    %v59 = vmax.f32 %v58, 0.0
    %s60 = sld [smem:[#allocation2 + $0x15]]
    %v61 = vstv %s60
    %v62 = vmul.f32 %v59, %v61
    %v63 = vadd.f32 %v52, %v62
    %s64 = sld [smem:[#allocation2 + $0x2]]
    %v65 = vstv %s64
    %v66 = vmul.f32 %v39, %v65
    %s67 = sld [smem:[#allocation2 + $0xc]]
    %v68 = vstv %s67
    %v69 = vadd.f32 %v66, %v68
    %v70 = vmax.f32 %v69, 0.0
    %s71 = sld [smem:[#allocation2 + $0x16]]
    %v72 = vstv %s71
    %v73 = vmul.f32 %v70, %v72
    %v74 = vadd.f32 %v63, %v73
    %s75 = sld [smem:[#allocation2 + $0x3]]
    %v76 = vstv %s75
    %v77 = vmul.f32 %v39, %v76
    %s78 = sld [smem:[#allocation2 + $0xd]]
    %v79 = vstv %s78
    %v80 = vadd.f32 %v77, %v79
    %v81 = vmax.f32 %v80, 0.0
    %s82 = sld [smem:[#allocation2 + $0x17]]
    %v83 = vstv %s82
    %v84 = vmul.f32 %v81, %v83
    %v85 = vadd.f32 %v74, %v84
    %s86 = sld [smem:[#allocation2 + $0x4]]
    %v87 = vstv %s86
    %v88 = vmul.f32 %v39, %v87
    %s89 = sld [smem:[#allocation2 + $0xe]]
    %v90 = vstv %s89
    %v91 = vadd.f32 %v88, %v90
    %v92 = vmax.f32 %v91, 0.0
    %s93 = sld [smem:[#allocation2 + $0x18]]
    %v94 = vstv %s93
    %v95 = vmul.f32 %v92, %v94
    %v96 = vadd.f32 %v85, %v95
    %s97 = sld [smem:[#allocation2 + $0x5]]
    %v98 = vstv %s97
    %v99 = vmul.f32 %v39, %v98
    %s100 = sld [smem:[#allocation2 + $0xf]]
    %v101 = vstv %s100
    %v102 = vadd.f32 %v99, %v101
    %v103 = vmax.f32 %v102, 0.0
    %s104 = sld [smem:[#allocation2 + $0x19]]
    %v105 = vstv %s104
    %v106 = vmul.f32 %v103, %v105
    %v107 = vadd.f32 %v96, %v106
    %s108 = sld [smem:[#allocation2 + $0x6]]
    %v109 = vstv %s108
    %v110 = vmul.f32 %v39, %v109
    %s111 = sld [smem:[#allocation2 + $0x10]]
    %v112 = vstv %s111
    %v113 = vadd.f32 %v110, %v112
    %v114 = vmax.f32 %v113, 0.0
    %s115 = sld [smem:[#allocation2 + $0x1a]]
    %v116 = vstv %s115
    %v117 = vmul.f32 %v114, %v116
    %v118 = vadd.f32 %v107, %v117
    %s119 = sld [smem:[#allocation2 + $0x7]]
    %v120 = vstv %s119
    %v121 = vmul.f32 %v39, %v120
    %s122 = sld [smem:[#allocation2 + $0x11]]
    %v123 = vstv %s122
    %v124 = vadd.f32 %v121, %v123
    %v125 = vmax.f32 %v124, 0.0
    %s126 = sld [smem:[#allocation2 + $0x1b]]
    %v127 = vstv %s126
    %v128 = vmul.f32 %v125, %v127
    %v129 = vadd.f32 %v118, %v128
    %s130 = sld [smem:[#allocation2 + $0x8]]
    %v131 = vstv %s130
    %v132 = vmul.f32 %v39, %v131
    %s133 = sld [smem:[#allocation2 + $0x12]]
    %v134 = vstv %s133
    %v135 = vadd.f32 %v132, %v134
    %v136 = vmax.f32 %v135, 0.0
    %s137 = sld [smem:[#allocation2 + $0x1c]]
    %v138 = vstv %s137
    %v139 = vmul.f32 %v136, %v138
    %v140 = vadd.f32 %v129, %v139
    %s141 = sld [smem:[#allocation2 + $0x9]]
    %v142 = vstv %s141
    %v143 = vmul.f32 %v39, %v142
    %s144 = sld [smem:[#allocation2 + $0x13]]
    %v145 = vstv %s144
    %v146 = vadd.f32 %v143, %v145
    %v147 = vmax.f32 %v146, 0.0
    %s148 = sld [smem:[#allocation2 + $0x1d]]
    %v149 = vstv %s148
    %v150 = vmul.f32 %v147, %v149
    %v151 = vadd.f32 %v140, %v150
    %152 = vst [vmem:[#allocation7] sm:$0xff] %v151
    // Predicated region
    $region18: #{tpu_custom_call.1} parent=1 // pred_check
      _
    $region19: #{tpu_custom_call.1} parent=1 // pred_check_branch
      %154 = sbr.rel (0) target = $region21
    $region20: #{tpu_custom_call.1} parent=1 // pred_region
      %156 = vsyncadd [#allocation4], 0
      %s158 = sshll.u32 [#allocation7], 4
      %s159 = int_to_ptr.vmem [resolvable:$true] %s158
      %s160 = sshll.u32 %s2, 4
      %s161 = int_to_ptr.hbm [resolvable:$true] %s160
      %163 = dma.vmem_to_hbm [thread:$0]  %s159, 128, %s161, [#allocation4]
    $region21: #{tpu_custom_call.1} parent=1 // pred_fallthru
      _
    // Predicated region
    $region22: #{tpu_custom_call.1} parent=1 // pred_check
      _
    $region23: #{tpu_custom_call.1} parent=1 // pred_check_branch
      %165 = sbr.rel (0) target = $region25
    $region24: #{tpu_custom_call.1} parent=1 // pred_region
      %167 = dma.done [#allocation4], 128
    $region25: #{tpu_custom_call.1} parent=1 // pred_fallthru
      _
    %168 = vsyncpa [#allocation3], 1
    %169 = vsyncpa [#allocation4], 1
    %170 = vsyncpa [#allocation5], 1

</llo_original>
